<compile_context>
chip_gen: v6e
topology: v6e:2x2x1
jax: 0.10.0
libtpu: 0.0.40
codegen_flags: <defaults>
</compile_context>

<pallas_src>
import functools

import jax
import jax.numpy as jnp
from jax.experimental import pallas as pl
from jax.experimental.pallas import tpu as pltpu

IN_DIM = 3
HIDDEN_DIM = 6
OUT_DIM = 3
BATCH = 1

PB = 8          # padded batch (sublanes)
PF = 128        # padded hidden dim (lanes)
K1 = 8          # packed input width: [x0, x1, x2, t, 0, 0, 0, 1]
OUT_PAD = 8     # padded output width (real lanes: 0..2)
T_LANE = 3      # input lane holding t
ONES_LANE = 7   # input lane holding the constant 1.0 (drives layer-1 biases)
HX_OFF = 0      # hidden lanes [0:6)  used by the fx branch
HT_OFF = 64     # hidden lanes [64:70) used by the ft branch (disjoint from fx)
BIAS_LANE = 127  # reserved hidden lane forced to 1.0 (drives layer-2 biases)


def ode_func_kernel(xt_ref, w1_ref, w2_ref, o_ref):
    """Fused fx(x)+ft(t): dot -> relu -> dot, biases folded into the weights."""
    h = jnp.maximum(
        jnp.dot(xt_ref[...], w1_ref[...], preferred_element_type=jnp.float32), 0.0)
    o_ref[...] = jnp.dot(h, w2_ref[...], preferred_element_type=jnp.float32)


def euler_fused_kernel(dt_ref, xt_ref, w1_ref, w2_ref, o_ref, *, num_steps):
    """x <- x + dt * (fx(x)+ft(t)), looped num_steps times with weights in VMEM.

    The packed state xt carries x (lanes 0:3), t (lane 3) and the constant 1.0
    (lane 7).  f has zeros in lanes >= OUT_DIM (W2 columns 3:8 are zero), so
    `xt + dt*f` updates only the x lanes and preserves t / the ones lane.
    (t is held fixed between steps, matching the reference single-step usage.)
    """
    dt = dt_ref[0]
    w1 = w1_ref[...]
    w2 = w2_ref[...]

    def body(_, xt):
        h = jnp.maximum(jnp.dot(xt, w1, preferred_element_type=jnp.float32), 0.0)
        f = jnp.dot(h, w2, preferred_element_type=jnp.float32)
        return xt + dt * f

    o_ref[...] = jax.lax.fori_loop(0, num_steps, body, xt_ref[...], unroll=True)


def init_raw_params(key):
    """Deterministic init mimicking PyTorch Linear's U(-1/sqrt(fan_in), 1/sqrt(fan_in))."""
    ks = jax.random.split(key, 8)

    def lin(kw, kb, fan_in, fan_out):
        bound = 1.0 / jnp.sqrt(jnp.asarray(fan_in, jnp.float32))
        w = jax.random.uniform(kw, (fan_in, fan_out), jnp.float32, -bound, bound)
        b = jax.random.uniform(kb, (1, fan_out), jnp.float32, -bound, bound)
        return w, b

    wx1, bx1 = lin(ks[0], ks[1], IN_DIM, HIDDEN_DIM)
    wx2, bx2 = lin(ks[2], ks[3], HIDDEN_DIM, OUT_DIM)
    wt1, bt1 = lin(ks[4], ks[5], 1, HIDDEN_DIM)
    wt2, bt2 = lin(ks[6], ks[7], HIDDEN_DIM, OUT_DIM)
    return dict(wx1=wx1, bx1=bx1, wx2=wx2, bx2=bx2,
                wt1=wt1, bt1=bt1, wt2=wt2, bt2=bt2)


def pack_params(p):
    """One-time packing of both branches + all biases into two padded matrices."""
    # W1: (K1=8, 128).  x rows -> fx hidden lanes, t row -> ft hidden lanes,
    # ones row -> layer-1 biases + the 1.0 that survives ReLU in BIAS_LANE.
    w1 = jnp.zeros((K1, PF), jnp.float32)
    w1 = w1.at[:IN_DIM, HX_OFF:HX_OFF + HIDDEN_DIM].set(p["wx1"])
    w1 = w1.at[T_LANE, HT_OFF:HT_OFF + HIDDEN_DIM].set(p["wt1"][0])
    w1 = w1.at[ONES_LANE, HX_OFF:HX_OFF + HIDDEN_DIM].set(p["bx1"][0])
    w1 = w1.at[ONES_LANE, HT_OFF:HT_OFF + HIDDEN_DIM].set(p["bt1"][0])
    w1 = w1.at[ONES_LANE, BIAS_LANE].set(1.0)

    # W2: (128, OUT_PAD=8).  Row BIAS_LANE carries b2 = bx2 + bt2.
    w2 = jnp.zeros((PF, OUT_PAD), jnp.float32)
    w2 = w2.at[HX_OFF:HX_OFF + HIDDEN_DIM, :OUT_DIM].set(p["wx2"])
    w2 = w2.at[HT_OFF:HT_OFF + HIDDEN_DIM, :OUT_DIM].set(p["wt2"])
    w2 = w2.at[BIAS_LANE, :OUT_DIM].set((p["bx2"] + p["bt2"])[0])

    return dict(w1=w1, w2=w2)


def pack_state(x, t):
    """Pack x, t and the constant-1 lane into the padded (PB, K1) activation."""
    xt = jnp.zeros((PB, K1), jnp.float32)
    xt = xt.at[:x.shape[0], :IN_DIM].set(x)
    xt = xt.at[:t.shape[0], T_LANE].set(t[:, 0])
    xt = xt.at[:, ONES_LANE].set(1.0)   # all rows, so the bias fold is uniform
    return xt


_VMEM = pl.BlockSpec(memory_space=pltpu.MemorySpace.VMEM)
_SMEM = pl.BlockSpec(memory_space=pltpu.MemorySpace.SMEM)


@jax.jit
def ode_func_forward(x, t, packed):
    """x: (BATCH, IN_DIM) f32, t: (BATCH, 1) f32 -> (BATCH, OUT_DIM) f32."""
    xt = pack_state(x, t)

    flops = 2 * (PB * K1 * PF + PB * PF * OUT_PAD)
    bytes_accessed = 4 * (PB * K1 + K1 * PF + PF * OUT_PAD + PB * OUT_PAD)

    out_p = pl.pallas_call(
        ode_func_kernel,
        out_shape=jax.ShapeDtypeStruct((PB, OUT_PAD), jnp.float32),
        in_specs=[_VMEM, _VMEM, _VMEM],
        out_specs=_VMEM,
        cost_estimate=pl.CostEstimate(flops=flops, transcendentals=0,
                                      bytes_accessed=bytes_accessed),
    )(xt, packed["w1"], packed["w2"])

    return out_p[:BATCH, :OUT_DIM]


@functools.partial(jax.jit, static_argnames=("num_steps",))
def euler_solve(x, t, dt, packed, *, num_steps=1):
    """Fused Euler solver: x <- x + dt * ODE_FUNC(x, t), num_steps times,
    entirely inside one pallas_call (weights stay resident in VMEM)."""
    xt = pack_state(x, t)
    dt_arr = jnp.reshape(jnp.asarray(dt, jnp.float32), (1,))

    flops = 2 * num_steps * (PB * K1 * PF + PB * PF * OUT_PAD)
    bytes_accessed = 4 * (PB * K1 + K1 * PF + PF * OUT_PAD + PB * K1 + 1)

    xt_new = pl.pallas_call(
        functools.partial(euler_fused_kernel, num_steps=num_steps),
        out_shape=jax.ShapeDtypeStruct((PB, K1), jnp.float32),
        in_specs=[_SMEM, _VMEM, _VMEM, _VMEM],
        out_specs=_VMEM,
        cost_estimate=pl.CostEstimate(flops=flops, transcendentals=0,
                                      bytes_accessed=bytes_accessed),
    )(dt_arr, xt, packed["w1"], packed["w2"])

    # Only row 0, lanes 0:3 are the real state (padded rows accumulate
    # bias-only garbage and are never read).
    return xt_new[:BATCH, :IN_DIM]


def reference_forward(x, t, p):
    hx = jnp.maximum(x @ p["wx1"] + p["bx1"], 0.0)
    ox = hx @ p["wx2"] + p["bx2"]
    ht = jnp.maximum(t @ p["wt1"] + p["bt1"], 0.0)
    ot = ht @ p["wt2"] + p["bt2"]
    return ox + ot


if __name__ == "__main__":
    key = jax.random.PRNGKey(0)
    k_param, k_x = jax.random.split(key)

    raw_params = init_raw_params(k_param)
    packed_params = pack_params(raw_params)      # done once, reused every step

    x = jax.random.normal(k_x, (BATCH, IN_DIM), jnp.float32)
    t = jnp.ones((BATCH, 1), jnp.float32)

    # Forward pass f = ODE_FUNC(x, t)
    f = jax.block_until_ready(ode_func_forward(x, t, packed_params))
    ref_f = reference_forward(x, t, raw_params)
    assert jnp.allclose(f, ref_f, atol=1e-5, rtol=1e-5), (f, ref_f)

    # Euler step x = x + f * 1, fully fused into one kernel launch.
    x_new = jax.block_until_ready(
        euler_solve(x, t, 1.0, packed_params, num_steps=1))
    ref_x_new = x + ref_f * 1.0
    assert jnp.allclose(x_new, ref_x_new, atol=1e-5, rtol=1e-5), (x_new, ref_x_new)

    # TODO(synk): get_trace() (autograd-based Jacobian trace) is not part of the
    # forward pass and is not implemented here.
    print("KERNEL_OK")
</pallas_src>

<mosaic_0001>
module attributes {stable_mosaic.version = 11 : i64} {
  func.func @ode_func_kernel(%arg0: memref<8x8xf32, #tpu.memory_space<vmem>>, %arg1: memref<8x128xf32, #tpu.memory_space<vmem>>, %arg2: memref<128x8xf32, #tpu.memory_space<vmem>>, %arg3: memref<8x8xf32, #tpu.memory_space<vmem>>) attributes {dimension_semantics = [], scalar_prefetch = 0 : i64, scratch_operands = 0 : i64, tpu.core_type = #tpu.core_type<tc>} {
    %c0 = arith.constant 0 : index
    %c0_0 = arith.constant 0 : index
    %0 = vector.load %arg0[%c0, %c0_0] : memref<8x8xf32, #tpu.memory_space<vmem>>, vector<8x8xf32>
    %c0_1 = arith.constant 0 : index
    %c0_2 = arith.constant 0 : index
    %1 = vector.load %arg1[%c0_1, %c0_2] : memref<8x128xf32, #tpu.memory_space<vmem>>, vector<8x128xf32>
    %cst = arith.constant dense<0.000000e+00> : vector<8x128xf32>
    %2 = tpu.matmul %0, %1, %cst {dimension_numbers = #tpu.dot_dimension_numbers<[1], [0], [0], [1], [0, 0, 1, 1], [], []>} : vector<8x8xf32>, vector<8x128xf32>, vector<8x128xf32> -> vector<8x128xf32>
    %cst_3 = arith.constant 0.000000e+00 : f32
    %3 = vector.broadcast %cst_3 : f32 to vector<8x128xf32>
    %4 = arith.maximumf %2, %3 : vector<8x128xf32>
    %c0_4 = arith.constant 0 : index
    %c0_5 = arith.constant 0 : index
    %5 = vector.load %arg2[%c0_4, %c0_5] : memref<128x8xf32, #tpu.memory_space<vmem>>, vector<128x8xf32>
    %cst_6 = arith.constant dense<0.000000e+00> : vector<8x8xf32>
    %6 = tpu.matmul %4, %5, %cst_6 {dimension_numbers = #tpu.dot_dimension_numbers<[1], [0], [0], [1], [0, 0, 1, 1], [], []>} : vector<8x128xf32>, vector<128x8xf32>, vector<8x8xf32> -> vector<8x8xf32>
    %c0_7 = arith.constant 0 : index
    %c0_8 = arith.constant 0 : index
    %7 = vector.load %arg3[%c0_7, %c0_8] : memref<8x8xf32, #tpu.memory_space<vmem>>, vector<8x8xf32>
    tpu.vector_store %arg3[%c0_7, %c0_8], %6 {strides = array<i32>} : memref<8x8xf32, #tpu.memory_space<vmem>>, vector<8x8xf32>,
    return
  }
}

</mosaic_0001>

<llo_original>
// kernel: ode_func_forward.1
$region0: #{ode_func_forward.1}
  #allocation0 [shape = 'u32[]', space=smem, size = 0x4, offset = 0x4, fixed_abs, tag = 'smem constant byte address 0x4 - core index']
  #allocation1 [shape = 'u32[144,128]{1,0:T(1,128)}', space=vmem, size = 0x12000, scoped, tag = 'internal scratch']
  %s0 = inlined_call_operand.vmem [shape: f32[8,8], index: 0, kind: input, shape index: {}]
  %s1 = inlined_call_operand.vmem [shape: f32[8,128], index: 1, kind: input, shape index: {}]
  %s2 = inlined_call_operand.vmem [shape: f32[128,8], index: 2, kind: input, shape index: {}]
  %s3 = inlined_call_operand.vmem [shape: f32[8,8], index: 3, kind: output, shape index: {}]
  %s4 = sld [smem:[#allocation0]]
  $region22: #{ode_func_forward.1} parent=0
    _
  %s6 = ssub.s32 1, %s4
  %s7 = scalar_select 0, %s6, %s4
  // Predicated region
  $region2: #{ode_func_forward.1} parent=0 // pred_check
    _
  $region3: #{ode_func_forward.1} parent=0 // pred_check_branch
    %9 = sbr.rel (0) target = $region5
  $region4: #{ode_func_forward.1} parent=0 // pred_region
    _
  $region5: #{ode_func_forward.1} parent=0 // pred_fallthru
    _
  // Predicated region
  $region6: #{ode_func_forward.1} parent=0 // pred_check
    _
  $region7: #{ode_func_forward.1} parent=0 // pred_check_branch
    %11 = sbr.rel (0) target = $region9
  $region8: #{ode_func_forward.1} parent=0 // pred_region
    _
  $region9: #{ode_func_forward.1} parent=0 // pred_fallthru
    _
  // Predicated region
  $region10: #{ode_func_forward.1} parent=0 // pred_check
    _
  $region11: #{ode_func_forward.1} parent=0 // pred_check_branch
    %13 = sbr.rel (0) target = $region13
  $region12: #{ode_func_forward.1} parent=0 // pred_region
    _
  $region13: #{ode_func_forward.1} parent=0 // pred_fallthru
    _
  %v14 = vld [vmem:[%s0] sm:$0xff]
  %v15 = vld [vmem:[%s1] sm:$0xff]
  %vm16 = vcmask 64512
  %v18 = vsel %vm16, %v14, 0
  %20 = vmatprep.subr.mxu0 0.0
  %21 = vmatpush1.msra.mxu0 0.0
  %22 = vmatprep.subr.mxu0 0.0
  %23 = vmatpush1.msra.mxu0 0.0
  %24 = vmatprep.subr.mxu0 0.0
  %25 = vmatpush1.msra.mxu0 0.0
  %26 = vmatprep.subr.mxu0 0.0
  %27 = vmatpush1.msra.mxu0 0.0
  %28 = vmatprep.subr.mxu0 0.0
  %29 = vmatpush1.msra.mxu0 0.0
  %30 = vmatprep.subr.mxu0 0.0
  %31 = vmatpush1.msra.mxu0 0.0
  %32 = vmatprep.subr.mxu0 0.0
  %33 = vmatpush1.msra.mxu0 0.0
  %34 = vmatprep.subr.mxu0 0.0
  %35 = vmatpush1.msra.mxu0 0.0
  %36 = vmatprep.subr.mxu0 0.0
  %37 = vmatpush1.msra.mxu0 0.0
  %38 = vmatprep.subr.mxu0 0.0
  %39 = vmatpush1.msra.mxu0 0.0
  %40 = vmatprep.subr.mxu0 0.0
  %41 = vmatpush1.msra.mxu0 0.0
  %42 = vmatprep.subr.mxu0 0.0
  %43 = vmatpush1.msra.mxu0 0.0
  %44 = vmatprep.subr.mxu0 0.0
  %45 = vmatpush1.msra.mxu0 0.0
  %46 = vmatprep.subr.mxu0 0.0
  %47 = vmatpush1.msra.mxu0 0.0
  %48 = vmatprep.subr.mxu0 0.0
  %49 = vmatpush1.msra.mxu0 0.0
  %50 = vmatprep.subr.mxu0 0.0
  %51 = vmatpush1.msra.mxu0 %v15
  %52 = vmatprep.subr.mxu0 0.0
  %53 = vmatpush2.msra.mxu0 0.0
  %54 = vmatprep.subr.mxu0 0.0
  %55 = vmatpush2.msra.mxu0 0.0
  %56 = vmatprep.subr.mxu0 0.0
  %57 = vmatpush2.msra.mxu0 0.0
  %58 = vmatprep.subr.mxu0 0.0
  %59 = vmatpush2.msra.mxu0 0.0
  %60 = vmatprep.subr.mxu0 0.0
  %61 = vmatpush2.msra.mxu0 0.0
  %62 = vmatprep.subr.mxu0 0.0
  %63 = vmatpush2.msra.mxu0 0.0
  %64 = vmatprep.subr.mxu0 0.0
  %65 = vmatpush2.msra.mxu0 0.0
  %66 = vmatprep.subr.mxu0 0.0
  %67 = vmatpush2.msra.mxu0 0.0
  %68 = vmatprep.subr.mxu0 0.0
  %69 = vmatpush2.msra.mxu0 0.0
  %70 = vmatprep.subr.mxu0 0.0
  %71 = vmatpush2.msra.mxu0 0.0
  %72 = vmatprep.subr.mxu0 0.0
  %73 = vmatpush2.msra.mxu0 0.0
  %74 = vmatprep.subr.mxu0 0.0
  %75 = vmatpush2.msra.mxu0 0.0
  %76 = vmatprep.subr.mxu0 0.0
  %77 = vmatpush2.msra.mxu0 0.0
  %78 = vmatprep.subr.mxu0 0.0
  %79 = vmatpush2.msra.mxu0 0.0
  %80 = vmatprep.subr.mxu0 0.0
  %81 = vmatpush2.msra.mxu0 0.0
  %82 = vmatprep.subr.mxu0 0.0
  %83 = vmatpush2.msra.mxu0 0.0
  %84 = vmatprep.mubr.f32.mxu0 0.0
  %85 = vmatmul.mubr.f32.gmra.mxu0 %v18
  %v86 = vpop.f32.mrf.mxu0
  %v87 = vadd.f32 0.0, %v86
  %v88 = vpop.f32.mrf.mxu0
  %89 = vdwg.mxu0
  %v90 = vmax.f32 %v87, 0.0
  %v91 = vld [vmem:[%s2] sm:$0xff]
  %v92 = vld [vmem:[%s2 + $0x8] sm:$0xff]
  %v93 = vld [vmem:[%s2 + $0x10] sm:$0xff]
  %v94 = vld [vmem:[%s2 + $0x18] sm:$0xff]
  %v95 = vld [vmem:[%s2 + $0x20] sm:$0xff]
  %v96 = vld [vmem:[%s2 + $0x28] sm:$0xff]
  %v97 = vld [vmem:[%s2 + $0x30] sm:$0xff]
  %v98 = vld [vmem:[%s2 + $0x38] sm:$0xff]
  %v99 = vld [vmem:[%s2 + $0x40] sm:$0xff]
  %v100 = vld [vmem:[%s2 + $0x48] sm:$0xff]
  %v101 = vld [vmem:[%s2 + $0x50] sm:$0xff]
  %v102 = vld [vmem:[%s2 + $0x58] sm:$0xff]
  %v103 = vld [vmem:[%s2 + $0x60] sm:$0xff]
  %v104 = vld [vmem:[%s2 + $0x68] sm:$0xff]
  %v105 = vld [vmem:[%s2 + $0x70] sm:$0xff]
  %v106 = vld [vmem:[%s2 + $0x78] sm:$0xff]
  %107 = vmatprep.subr.mxu0 0.0
  %108 = vmatpush1.msra.mxu0 %v106
  %109 = vmatprep.subr.mxu0 0.0
  %110 = vmatpush1.msra.mxu0 %v105
  %111 = vmatprep.subr.mxu0 0.0
  %112 = vmatpush1.msra.mxu0 %v104
  %113 = vmatprep.subr.mxu0 0.0
  %114 = vmatpush1.msra.mxu0 %v103
  %115 = vmatprep.subr.mxu0 0.0
  %116 = vmatpush1.msra.mxu0 %v102
  %117 = vmatprep.subr.mxu0 0.0
  %118 = vmatpush1.msra.mxu0 %v101
  %119 = vmatprep.subr.mxu0 0.0
  %120 = vmatpush1.msra.mxu0 %v100
  %121 = vmatprep.subr.mxu0 0.0
  %122 = vmatpush1.msra.mxu0 %v99
  %123 = vmatprep.subr.mxu0 0.0
  %124 = vmatpush1.msra.mxu0 %v98
  %125 = vmatprep.subr.mxu0 0.0
  %126 = vmatpush1.msra.mxu0 %v97
  %127 = vmatprep.subr.mxu0 0.0
  %128 = vmatpush1.msra.mxu0 %v96
  %129 = vmatprep.subr.mxu0 0.0
  %130 = vmatpush1.msra.mxu0 %v95
  %131 = vmatprep.subr.mxu0 0.0
  %132 = vmatpush1.msra.mxu0 %v94
  %133 = vmatprep.subr.mxu0 0.0
  %134 = vmatpush1.msra.mxu0 %v93
  %135 = vmatprep.subr.mxu0 0.0
  %136 = vmatpush1.msra.mxu0 %v92
  %137 = vmatprep.subr.mxu0 0.0
  %138 = vmatpush1.msra.mxu0 %v91
  %139 = vmatprep.subr.mxu0 0.0
  %140 = vmatpush2.msra.mxu0 0.0
  %141 = vmatprep.subr.mxu0 0.0
  %142 = vmatpush2.msra.mxu0 0.0
  %143 = vmatprep.subr.mxu0 0.0
  %144 = vmatpush2.msra.mxu0 0.0
  %145 = vmatprep.subr.mxu0 0.0
  %146 = vmatpush2.msra.mxu0 0.0
  %147 = vmatprep.subr.mxu0 0.0
  %148 = vmatpush2.msra.mxu0 0.0
  %149 = vmatprep.subr.mxu0 0.0
  %150 = vmatpush2.msra.mxu0 0.0
  %151 = vmatprep.subr.mxu0 0.0
  %152 = vmatpush2.msra.mxu0 0.0
  %153 = vmatprep.subr.mxu0 0.0
  %154 = vmatpush2.msra.mxu0 0.0
  %155 = vmatprep.subr.mxu0 0.0
  %156 = vmatpush2.msra.mxu0 0.0
  %157 = vmatprep.subr.mxu0 0.0
  %158 = vmatpush2.msra.mxu0 0.0
  %159 = vmatprep.subr.mxu0 0.0
  %160 = vmatpush2.msra.mxu0 0.0
  %161 = vmatprep.subr.mxu0 0.0
  %162 = vmatpush2.msra.mxu0 0.0
  %163 = vmatprep.subr.mxu0 0.0
  %164 = vmatpush2.msra.mxu0 0.0
  %165 = vmatprep.subr.mxu0 0.0
  %166 = vmatpush2.msra.mxu0 0.0
  %167 = vmatprep.subr.mxu0 0.0
  %168 = vmatpush2.msra.mxu0 0.0
  %169 = vmatprep.subr.mxu0 0.0
  %170 = vmatpush2.msra.mxu0 0.0
  %171 = vmatprep.mubr.f32.mxu0 0.0
  %172 = vmatmul.mubr.f32.gmra.mxu0 %v90
  %v173 = vpop.f32.mrf.mxu0
  %v174 = vadd.f32 0.0, %v173
  %v175 = vpop.f32.mrf.mxu0
  %176 = vdwg.mxu0
  %177 = vst.msk [vmem:[%s3] sm:$0xff] %vm16, %v174
  // Predicated region
  $region14: #{ode_func_forward.1} parent=0 // pred_check
    _
  $region15: #{ode_func_forward.1} parent=0 // pred_check_branch
    %179 = sbr.rel (0) target = $region17
  $region16: #{ode_func_forward.1} parent=0 // pred_region
    _
  $region17: #{ode_func_forward.1} parent=0 // pred_fallthru
    _
  // Predicated region
  $region18: #{ode_func_forward.1} parent=0 // pred_check
    _
  $region19: #{ode_func_forward.1} parent=0 // pred_check_branch
    %181 = sbr.rel (0) target = $region21
  $region20: #{ode_func_forward.1} parent=0 // pred_region
    _
  $region21: #{ode_func_forward.1} parent=0 // pred_fallthru
    _

</llo_original>
